<compile_context>
chip_gen: v7x
topology: tpu7x:2x2x1
jax: 0.10.0
libtpu: 0.0.40
codegen_flags: <defaults>
</compile_context>

<pallas_src>
import math

import jax
import jax.numpy as jnp
from jax import lax
from jax.experimental import pallas as pl
from jax.experimental.pallas import tpu as pltpu

LANE = 128
SUBLANE = 8


def _round_up(x, m):
    return (x + m - 1) // m * m


def dense_relu_kernel(x_ref, w_ref, b_ref, o_ref, acc_ref):
    # x_ref:   (tm, tk)  activation tile (compute dtype, e.g. bf16)
    # w_ref:   (tn, tk)  weight tile, PyTorch (N, K) layout (no transpose copy)
    # b_ref:   (1,  tn)  bias tile (f32)
    # o_ref:   (tm, tn)  output tile
    # acc_ref: (tm, tn)  f32 VMEM accumulator (persists across the K grid axis)
    k = pl.program_id(2)

    @pl.when(k == 0)
    def _():
        acc_ref[...] = jnp.zeros_like(acc_ref)

    # x @ w.T : contract last dim of both operands on the MXU, accumulate in f32.
    acc_ref[...] += lax.dot_general(
        x_ref[...],
        w_ref[...],
        dimension_numbers=(((1,), (1,)), ((), ())),
        preferred_element_type=jnp.float32,
    )

    @pl.when(k == pl.num_programs(2) - 1)
    def _():
        o_ref[...] = jnp.maximum(acc_ref[...] + b_ref[...], 0.0).astype(o_ref.dtype)


def dense_relu(x, weight, bias, *, compute_dtype=jnp.bfloat16, out_dtype=None,
               tm_max=256, tn_max=256, k_resident_max=2048):
    """y = relu(x @ weight.T + bias).  x: (..., K); weight: (N, K); bias: (N,)."""
    *lead, K = x.shape
    N, Kw = weight.shape
    assert K == Kw, (K, Kw)
    if out_dtype is None:
        out_dtype = x.dtype
    M = math.prod(lead) if lead else 1
    if M == 0:  # degenerate batch
        return jnp.zeros((*lead, N), dtype=out_dtype)

    x2 = x.reshape(M, K).astype(compute_dtype)
    w = weight.astype(compute_dtype)
    b = bias.astype(jnp.float32).reshape(1, N)

    # K (contraction) handling: single K step when it fits comfortably in VMEM,
    # otherwise tile K. Only K needs zero-padding (ragged K would contaminate the
    # contraction); ragged M / N tiles are safe (masked output stores).
    if K <= k_resident_max:
        tk, Kp = K, K
    else:
        Kp = _round_up(K, LANE)
        tk = next(t for t in (512, 256, 128) if Kp % t == 0)
        if Kp != K:
            x2 = jnp.pad(x2, ((0, 0), (0, Kp - K)))
            w = jnp.pad(w, ((0, 0), (0, Kp - K)))

    # Row / column tiles: full-extent blocks for small problems (never ragged there),
    # 256-multiples otherwise (full MXU occupancy on v6e/v7x, 128-granular for v5e).
    tm = M if M <= tm_max else tm_max
    tn = N if N <= tn_max else tn_max

    grid = (pl.cdiv(M, tm), pl.cdiv(N, tn), Kp // tk)

    cost = pl.CostEstimate(
        flops=2 * M * N * K,
        transcendentals=0,
        bytes_accessed=(M * Kp * x2.dtype.itemsize
                        + N * Kp * w.dtype.itemsize
                        + N * 4
                        + M * N * jnp.dtype(out_dtype).itemsize),
    )

    out = pl.pallas_call(
        dense_relu_kernel,
        out_shape=jax.ShapeDtypeStruct((M, N), out_dtype),
        grid_spec=pltpu.PrefetchScalarGridSpec(
            num_scalar_prefetch=0,
            grid=grid,
            in_specs=[
                pl.BlockSpec((tm, tk), lambda i, j, k: (i, k)),   # activations (streamed)
                pl.BlockSpec((tn, tk), lambda i, j, k: (j, k)),   # weight, (N, K) layout
                pl.BlockSpec((1, tn), lambda i, j, k: (0, j)),    # bias
            ],
            out_specs=pl.BlockSpec((tm, tn), lambda i, j, k: (i, j)),
            scratch_shapes=[pltpu.VMEM((tm, tn), jnp.float32)],
        ),
        compiler_params=pltpu.CompilerParams(
            dimension_semantics=("parallel", "parallel", "arbitrary"),
        ),
        cost_estimate=cost,
    )(x2, w, b)

    return out.reshape(*lead, N)


if __name__ == "__main__":
    # Dense(in_channels=32, out_channels=64), input (batch=2, seq=8, hidden=32)
    B, S, K, N = 2, 8, 32, 64

    key = jax.random.PRNGKey(0)
    kx, kw, kb = jax.random.split(key, 3)
    x = jax.random.normal(kx, (B, S, K), dtype=jnp.float32)
    weight = jax.random.normal(kw, (N, K), dtype=jnp.float32) * 0.1
    bias = jax.random.normal(kb, (N,), dtype=jnp.float32) * 0.1

    out = jax.block_until_ready(dense_relu(x, weight, bias))
    assert out.shape == (B, S, N), out.shape
    assert out.dtype == x.dtype, out.dtype

    # Reference matching the kernel's bf16 MXU inputs + f32 accumulation.
    xb = x.astype(jnp.bfloat16).astype(jnp.float32)
    wb = weight.astype(jnp.bfloat16).astype(jnp.float32)
    ref_bf16 = jnp.maximum(
        jnp.einsum("bsk,nk->bsn", xb, wb, preferred_element_type=jnp.float32) + bias, 0.0)
    err = float(jnp.max(jnp.abs(out.astype(jnp.float32) - ref_bf16)))
    assert err < 1e-3, err

    # Loose sanity check against the true f32 reference (bf16 rounding tolerance).
    ref_f32 = jnp.maximum(
        jnp.einsum("bsk,nk->bsn", x, weight, precision=lax.Precision.HIGHEST) + bias, 0.0)
    err32 = float(jnp.max(jnp.abs(out.astype(jnp.float32) - ref_f32)))
    assert err32 < 5e-2, err32

    print("KERNEL_OK")
</pallas_src>

<mosaic_0001>
module attributes {stable_mosaic.version = 11 : i64} {
  func.func @dense_relu_kernel(%arg0: i32, %arg1: i32, %arg2: i32, %arg3: memref<16x32xbf16, #tpu.memory_space<vmem>>, %arg4: memref<64x32xbf16, #tpu.memory_space<vmem>>, %arg5: memref<1x64xf32, #tpu.memory_space<vmem>>, %arg6: memref<16x64xf32, #tpu.memory_space<vmem>>, %arg7: memref<16x64xf32, #tpu.memory_space<vmem>>) attributes {dimension_semantics = [#tpu.dimension_semantics<parallel>, #tpu.dimension_semantics<parallel>, #tpu.dimension_semantics<arbitrary>], iteration_bounds = array<i64: 1, 1, 1>, scalar_prefetch = 0 : i64, scratch_operands = 1 : i64, tpu.core_type = #tpu.core_type<tc>, window_params = [{transform_indices = @transform_0, window_bounds = array<i64: 16, 32>}, {transform_indices = @transform_1, window_bounds = array<i64: 64, 32>}, {transform_indices = @transform_2, window_bounds = array<i64: 1, 64>}, {transform_indices = @transform_3, window_bounds = array<i64: 16, 64>}]} {
    %c0_i32 = arith.constant 0 : i32
    %0 = arith.cmpi eq, %arg2, %c0_i32 : i32
    %1 = arith.extui %0 : i1 to i32
    %c0_i32_0 = arith.constant 0 : i32
    %2 = arith.cmpi ne, %1, %c0_i32_0 : i32
    scf.if %2 {
      %cst_10 = arith.constant 0.000000e+00 : f32
      %12 = vector.broadcast %cst_10 : f32 to vector<16x64xf32>
      %c0_11 = arith.constant 0 : index
      %c0_12 = arith.constant 0 : index
      %13 = vector.load %arg7[%c0_11, %c0_12] : memref<16x64xf32, #tpu.memory_space<vmem>>, vector<16x64xf32>
      tpu.vector_store %arg7[%c0_11, %c0_12], %12 {strides = array<i32>} : memref<16x64xf32, #tpu.memory_space<vmem>>, vector<16x64xf32>,
    } else {
    }
    %c0 = arith.constant 0 : index
    %c0_1 = arith.constant 0 : index
    %3 = vector.load %arg7[%c0, %c0_1] : memref<16x64xf32, #tpu.memory_space<vmem>>, vector<16x64xf32>
    %c0_2 = arith.constant 0 : index
    %c0_3 = arith.constant 0 : index
    %4 = vector.load %arg3[%c0_2, %c0_3] : memref<16x32xbf16, #tpu.memory_space<vmem>>, vector<16x32xbf16>
    %c0_4 = arith.constant 0 : index
    %c0_5 = arith.constant 0 : index
    %5 = vector.load %arg4[%c0_4, %c0_5] : memref<64x32xbf16, #tpu.memory_space<vmem>>, vector<64x32xbf16>
    %cst = arith.constant dense<0.000000e+00> : vector<16x64xf32>
    %6 = tpu.matmul %4, %5, %cst {dimension_numbers = #tpu.dot_dimension_numbers<[1], [1], [0], [0], [0, 0, 1, 0], [], []>} : vector<16x32xbf16>, vector<64x32xbf16>, vector<16x64xf32> -> vector<16x64xf32>
    %7 = arith.addf %3, %6 : vector<16x64xf32>
    %c0_6 = arith.constant 0 : index
    %c0_7 = arith.constant 0 : index
    %8 = vector.load %arg7[%c0_6, %c0_7] : memref<16x64xf32, #tpu.memory_space<vmem>>, vector<16x64xf32>
    tpu.vector_store %arg7[%c0_6, %c0_7], %7 {strides = array<i32>} : memref<16x64xf32, #tpu.memory_space<vmem>>, vector<16x64xf32>,
    %c0_i32_8 = arith.constant 0 : i32
    %9 = arith.cmpi eq, %arg2, %c0_i32_8 : i32
    %10 = arith.extui %9 : i1 to i32
    %c0_i32_9 = arith.constant 0 : i32
    %11 = arith.cmpi ne, %10, %c0_i32_9 : i32
    scf.if %11 {
      %c0_10 = arith.constant 0 : index
      %c0_11 = arith.constant 0 : index
      %12 = vector.load %arg7[%c0_10, %c0_11] : memref<16x64xf32, #tpu.memory_space<vmem>>, vector<16x64xf32>
      %c0_12 = arith.constant 0 : index
      %c0_13 = arith.constant 0 : index
      %13 = vector.load %arg5[%c0_12, %c0_13] : memref<1x64xf32, #tpu.memory_space<vmem>>, vector<1x64xf32>
      %14 = vector.broadcast %13 : vector<1x64xf32> to vector<16x64xf32>
      %15 = arith.addf %12, %14 : vector<16x64xf32>
      %cst_14 = arith.constant 0.000000e+00 : f32
      %16 = vector.broadcast %cst_14 : f32 to vector<16x64xf32>
      %17 = arith.maximumf %15, %16 : vector<16x64xf32>
      %c0_15 = arith.constant 0 : index
      %c0_16 = arith.constant 0 : index
      %18 = vector.load %arg6[%c0_15, %c0_16] : memref<16x64xf32, #tpu.memory_space<vmem>>, vector<16x64xf32>
      tpu.vector_store %arg6[%c0_15, %c0_16], %17 {strides = array<i32>} : memref<16x64xf32, #tpu.memory_space<vmem>>, vector<16x64xf32>,
    } else {
    }
    return
  }
  func.func @transform_0(%arg0: i32, %arg1: i32, %arg2: i32) -> (i32, i32) {
    %c0_i32 = arith.constant 0 : i32
    return %arg0, %arg2 : i32, i32
  }
  func.func @transform_1(%arg0: i32, %arg1: i32, %arg2: i32) -> (i32, i32) {
    %c0_i32 = arith.constant 0 : i32
    return %arg1, %arg2 : i32, i32
  }
  func.func @transform_2(%arg0: i32, %arg1: i32, %arg2: i32) -> (i32, i32) {
    %c0_i32 = arith.constant 0 : i32
    %c0_i32_0 = arith.constant 0 : i32
    return %c0_i32, %arg1 : i32, i32
  }
  func.func @transform_3(%arg0: i32, %arg1: i32, %arg2: i32) -> (i32, i32) {
    %c0_i32 = arith.constant 0 : i32
    return %arg0, %arg1 : i32, i32
  }
}

</mosaic_0001>

<llo_original>
// kernel: tpu_custom_call.1
$region0: #{tpu_custom_call.1}
  #allocation0 [shape = 'u32[]', space=smem, size = 0x4, offset = 0x4, fixed_abs, tag = 'smem constant byte address 0x4 - core index']
  #allocation1 [shape = 'u32[144,128]{1,0:T(1,128)}', space=vmem, size = 0x12000, scoped, tag = 'internal scratch']
  #allocation2 [shape = 'f32[16,64]{1,0:T(8,128)}', space=vmem, size = 0x2000, scoped, tag = 'scratch operand']
  %s0 = inlined_call_operand.vmem [shape: bf16[16,32], index: 0, kind: input, shape index: {}]
  %s1 = inlined_call_operand.vmem [shape: bf16[64,32], index: 1, kind: input, shape index: {}]
  %s2 = inlined_call_operand.vmem [shape: f32[1,64], index: 2, kind: input, shape index: {}]
  %s3 = inlined_call_operand.hbm [shape: f32[16,64], index: 3, kind: output, shape index: {}]
  %s4 = sld [smem:[#allocation0]]
  $region30: #{tpu_custom_call.1} parent=0
    _
  %s6 = ssub.s32 1, %s4
  %s7 = scalar_select 0, %s6, %s4
  $region1: #{tpu_custom_call.1} parent=0
    #allocation3 [shape = 'u8[8192]{0}', space=vmem, size = 0x2000, scoped, tag = 'output window, operand 0, single buffered']
    #allocation4 [shape = 's32[1]{0}', space=sflag, size = 0x4, scoped, tag = 'scoped memory for tpu_custom_call.1']
    %8 = vsyncpa [#allocation4], 0
    // Predicated region
    $region2: #{tpu_custom_call.1} parent=1 // pred_check
      _
    $region3: #{tpu_custom_call.1} parent=1 // pred_check_branch
      %10 = sbr.rel (0) target = $region5
    $region4: #{tpu_custom_call.1} parent=1 // pred_region
      _
    $region5: #{tpu_custom_call.1} parent=1 // pred_fallthru
      _
    // Predicated region
    $region6: #{tpu_custom_call.1} parent=1 // pred_check
      _
    $region7: #{tpu_custom_call.1} parent=1 // pred_check_branch
      %12 = sbr.rel (0) target = $region9
    $region8: #{tpu_custom_call.1} parent=1 // pred_region
      _
    $region9: #{tpu_custom_call.1} parent=1 // pred_fallthru
      _
    // Predicated region
    $region10: #{tpu_custom_call.1} parent=1 // pred_check
      _
    $region11: #{tpu_custom_call.1} parent=1 // pred_check_branch
      %14 = sbr.rel (0) target = $region13
    $region12: #{tpu_custom_call.1} parent=1 // pred_region
      _
    $region13: #{tpu_custom_call.1} parent=1 // pred_fallthru
      _
    %p16 = scmp.eq.s32.totalorder 0, 0
    // Predicated region
    $region14: #{tpu_custom_call.1} parent=1 // pred_check
      %p17 = pneg %p16
    $region15: #{tpu_custom_call.1} parent=1 // pred_check_branch
      %19 = sbr.rel (%p17) target = $region17
    $region16: #{tpu_custom_call.1} parent=1 // pred_region
      %vm20 = vcmask 523264
      %21 = vst.msk [vmem:[#allocation2] sm:$0xff] %vm20, 0.0
      %22 = vst.msk [vmem:[#allocation2 + $0x8] sm:$0xff] %vm20, 0.0
    $region17: #{tpu_custom_call.1} parent=1 // pred_fallthru
      _
    %v23 = vld [vmem:[#allocation2] sm:$0xff]
    %v24 = vld [vmem:[#allocation2 + $0x8] sm:$0xff]
    %v25 = vld [vmem:[%s0] sm:$0xf]
    %v26 = vld [vmem:[%s0 + $0x4] sm:$0xf]
    %v27 = vld [vmem:[%s1] sm:$0xf]
    %v28 = vld [vmem:[%s1 + $0x4] sm:$0xf]
    %v29 = vld [vmem:[%s1 + $0x8] sm:$0xf]
    %v30 = vld [vmem:[%s1 + $0xc] sm:$0xf]
    %v31 = vld [vmem:[%s1 + $0x10] sm:$0xf]
    %v32 = vld [vmem:[%s1 + $0x14] sm:$0xf]
    %v33 = vld [vmem:[%s1 + $0x18] sm:$0xf]
    %v34 = vld [vmem:[%s1 + $0x1c] sm:$0xf]
    %v37 = vunpack.c.l.b16 %v25
    %v38 = vunpack.c.l.b16 %v26
    %v39 = vpack.c.b16 %v38, %v37
    %v48 = vunpack.c.l.b16 %v27
    %v49 = vunpack.c.l.b16 %v28
    %v50 = vunpack.c.l.b16 %v29
    %v51 = vunpack.c.l.b16 %v30
    %v52 = vunpack.c.l.b16 %v31
    %v53 = vunpack.c.l.b16 %v32
    %v54 = vunpack.c.l.b16 %v33
    %v55 = vunpack.c.l.b16 %v34
    %v56 = vpack.c.b16 %v49, %v48
    %v57 = vpack.c.b16 %v51, %v50
    %v58 = vpack.c.b16 %v53, %v52
    %v59 = vpack.c.b16 %v55, %v54
    %vm60 = vcmask 261120
    %v62 = vsel %vm60, %v39, 0
    %v65 = vsel %vm60, %v56, 0
    %v68 = vsel %vm60, %v57, 0
    %v71 = vsel %vm60, %v58, 0
    %v74 = vsel %vm60, %v59, 0
    %76 = vmatprep.subr.bf16.mxu0 0
    %77 = vmatpush1.bf16.xpose.msra.mxu0 %v65
    %78 = vmatprep.subr.bf16.mxu0 0
    %79 = vmatpush1.bf16.xpose.msra.mxu0 %v68
    %80 = vmatprep.subr.bf16.mxu0 0
    %81 = vmatpush1.bf16.xpose.msra.mxu0 %v71
    %82 = vmatprep.subr.bf16.mxu0 0
    %83 = vmatpush1.bf16.xpose.msra.mxu0 %v74
    %84 = vmatprep.subr.bf16.mxu0 0
    %85 = vmatpush1.bf16.xpose.msra.mxu0 0
    %86 = vmatprep.subr.bf16.mxu0 0
    %87 = vmatpush1.bf16.xpose.msra.mxu0 0
    %88 = vmatprep.subr.bf16.mxu0 0
    %89 = vmatpush1.bf16.xpose.msra.mxu0 0
    %90 = vmatprep.subr.bf16.mxu0 0
    %91 = vmatpush1.bf16.xpose.msra.mxu0 0
    %92 = vmatprep.subr.bf16.mxu0 0
    %93 = vmatpush1.bf16.xpose.msra.mxu0 0
    %94 = vmatprep.subr.bf16.mxu0 0
    %95 = vmatpush1.bf16.xpose.msra.mxu0 0
    %96 = vmatprep.subr.bf16.mxu0 0
    %97 = vmatpush1.bf16.xpose.msra.mxu0 0
    %98 = vmatprep.subr.bf16.mxu0 0
    %99 = vmatpush1.bf16.xpose.msra.mxu0 0
    %100 = vmatprep.subr.bf16.mxu0 0
    %101 = vmatpush1.bf16.xpose.msra.mxu0 0
    %102 = vmatprep.subr.bf16.mxu0 0
    %103 = vmatpush1.bf16.xpose.msra.mxu0 0
    %104 = vmatprep.subr.bf16.mxu0 0
    %105 = vmatpush1.bf16.xpose.msra.mxu0 0
    %106 = vmatprep.subr.bf16.mxu0 0
    %107 = vmatpush1.bf16.xpose.msra.mxu0 0
    %108 = vmatprep.mubr.bf16.mxu0 0
    %109 = vmatmul.mubr.bf16.gmra.mrb[0].mxu0 %v62
    %v110 = vpop.f32.mrb[0].mxu0
    %v111 = vadd.f32 0.0, %v110
    %v112 = vpop.f32.mrb[0].mxu0
    %v113 = vpop.f32.mrb[0].mxu0
    %v114 = vadd.f32 0.0, %v113
    %v115 = vpop.f32.mrb[0].mxu0
    %116 = vdwg.mxu0
    %v117 = vadd.f32 %v23, %v111
    %v118 = vadd.f32 %v24, %v114
    %vm119 = vcmask 523264
    %120 = vst.msk [vmem:[#allocation2] sm:$0xff] %vm119, %v117
    %121 = vst.msk [vmem:[#allocation2 + $0x8] sm:$0xff] %vm119, %v118
    // Predicated region
    $region18: #{tpu_custom_call.1} parent=1 // pred_check
      %p122 = pneg %p16
    $region19: #{tpu_custom_call.1} parent=1 // pred_check_branch
      %124 = sbr.rel (%p122) target = $region21
    $region20: #{tpu_custom_call.1} parent=1 // pred_region
      %v125 = vld [vmem:[#allocation2] sm:$0xff]
      %v126 = vld [vmem:[#allocation2 + $0x8] sm:$0xff]
      %v127 = vld [vmem:[%s2] sm:$0x1]
      %v129 = vlaneseq
      %v130 = vshrl.u32 %v129, 7
      %v131 = vsub.s32 0, %v130
      %v132 = vrot.slane %v127, %v131
      %v134 = vadd.f32 %v125, %v132
      %v135 = vadd.f32 %v126, %v132
      %v136 = vmax.f32 %v134, 0.0
      %v137 = vmax.f32 %v135, 0.0
      %138 = vst.msk [vmem:[#allocation3] sm:$0xff] %vm119, %v136
      %139 = vst.msk [vmem:[#allocation3 + $0x8] sm:$0xff] %vm119, %v137
    $region21: #{tpu_custom_call.1} parent=1 // pred_fallthru
      _
    // Predicated region
    $region22: #{tpu_custom_call.1} parent=1 // pred_check
      _
    $region23: #{tpu_custom_call.1} parent=1 // pred_check_branch
      %141 = sbr.rel (0) target = $region25
    $region24: #{tpu_custom_call.1} parent=1 // pred_region
      %s143 = ssub.s32 256, 256
      %144 = vsyncadd [#allocation4], %s143
      %s145 = sshll.u32 [#allocation3], 4
      %s146 = int_to_ptr.vmem [resolvable:$true] %s145
      %151 = dma.vmem_to_hbm [thread:$0]  %s146, 256, %s3, [#allocation4], 128, 128, 8
    $region25: #{tpu_custom_call.1} parent=1 // pred_fallthru
      _
    // Predicated region
    $region26: #{tpu_custom_call.1} parent=1 // pred_check
      _
    $region27: #{tpu_custom_call.1} parent=1 // pred_check_branch
      %153 = sbr.rel (0) target = $region29
    $region28: #{tpu_custom_call.1} parent=1 // pred_region
      %154 = dma.done [#allocation4], 256
    $region29: #{tpu_custom_call.1} parent=1 // pred_fallthru
      _
    %155 = vsyncpa [#allocation4], 1

</llo_original>
